<compile_context>
chip_gen: v5e
topology: v5e:2x2
jax: 0.10.0
libtpu: 0.0.40
codegen_flags: <defaults>
</compile_context>

<pallas_src>
import functools

import jax
import jax.numpy as jnp
import numpy as np
from jax.experimental import pallas as pl
from jax.experimental.pallas import tpu as pltpu


# --------------------------- kernel ---------------------------

def _style_split_kernel(x_ref, w_ref, b_ref, out_ref, *, cout_padded):
    """One batch tile: out = m1*m2 + m3 where [m1 | m2 | m3] = x @ W + b."""
    x = x_ref[...].astype(jnp.bfloat16)                                # no-op when producer emits bf16
    y = jnp.dot(x, w_ref[...], preferred_element_type=jnp.float32)    # [tb, 3*Cp], MXU bf16, f32 acc
    y = y + b_ref[...]                                                 # bias (gain pre-folded), f32
    m1 = y[:, :cout_padded]                                            # lane-aligned chunk slices
    m2 = y[:, cout_padded:2 * cout_padded]
    m3 = y[:, 2 * cout_padded:]
    out_ref[...] = (m1 * m2 + m3).astype(out_ref.dtype)                # f32 epilogue, cast on store


# --------------------------- tiling helpers ---------------------------

def _round_up(n, m):
    return ((n + m - 1) // m) * m


def _num_tensorcores_per_chip():
    """2 on v7x (megacore-sharded 'parallel' axis matters), 1 on v5e/v6e. Safe fallback: 1."""
    try:
        kind = jax.devices()[0].device_kind.lower()
    except Exception:
        return 1
    return 2 if any(tag in kind for tag in ("v7", "tpu7", "7x")) else 1


def _pick_tb(batch, n_cores):
    """Largest power-of-two batch tile <= 1024 dividing `batch`.

    On 2-TC chips (v7x) prefer an even number of grid steps (>=2) so the 'parallel' batch
    axis splits across both TensorCores; on 1-TC chips just take the biggest tile (a single
    grid step is fine and minimizes per-step overhead)."""
    pow2 = (1024, 512, 256, 128, 64, 32, 16, 8)
    if n_cores >= 2:
        for tb in pow2:
            steps = batch // tb
            if batch % tb == 0 and steps >= 2 and steps % 2 == 0:
                return tb
    for tb in pow2:
        if batch % tb == 0:
            return tb
    return batch  # unreachable once batch is padded to a multiple of 8


# --------------------------- param prep (host-side, once) ---------------------------

def prepare_style_split_params(w_pt, b_pt, *, lr_multiplier=1.0):
    """Fold StyleGAN runtime gains into the params once and lane-align the three chunks.

    w_pt: [3*out, in] (PyTorch convention, already divided by lr_multiplier at init)
    b_pt: [3*out]
    Returns (w, b, cout, cout_padded):
      w [in, 3*Cp] bf16 with weight_gain folded, each chunk zero-padded to Cp (128-multiple);
      b [1, 3*Cp] f32 with bias_gain folded, padded the same way.
    Gains are applied in f32 before the bf16 cast (scale-invariant, no mantissa loss)."""
    three_out, in_f = w_pt.shape
    cout = three_out // 3
    assert 3 * cout == three_out
    cp = max(_round_up(cout, 128), 128)

    w_gain = lr_multiplier / float(np.sqrt(in_f))
    b_gain = lr_multiplier
    w_f32 = (jnp.asarray(w_pt, jnp.float32) * w_gain).T       # [in, 3*Cout]
    b_f32 = jnp.asarray(b_pt, jnp.float32) * b_gain            # [3*Cout]

    if cp != cout:
        pad = cp - cout
        w_chunks = [jnp.pad(w_f32[:, k * cout:(k + 1) * cout], ((0, 0), (0, pad))) for k in range(3)]
        b_chunks = [jnp.pad(b_f32[k * cout:(k + 1) * cout], (0, pad)) for k in range(3)]
        w_f32 = jnp.concatenate(w_chunks, axis=1)              # [in, 3*Cp]
        b_f32 = jnp.concatenate(b_chunks)                      # [3*Cp]

    w = w_f32.astype(jnp.bfloat16)
    b = b_f32.reshape(1, 3 * cp)
    return w, b, cout, cp


# --------------------------- forward wrapper ---------------------------

def style_split_forward(x, w, b, *, out_channels, cout_padded=None, tb=None,
                        out_dtype=jnp.bfloat16):
    """x: [B, Cin] (bf16 preferred); w: [Cin, 3*Cp] bf16 (gains folded); b: [1, 3*Cp] f32.

    Returns [B, out_channels] in `out_dtype` (default bf16; pass jnp.float32 if the consumer
    needs f32)."""
    B, Cin = x.shape
    three_cp = w.shape[1]
    cp = cout_padded if cout_padded is not None else three_cp // 3
    assert three_cp == 3 * cp and b.shape == (1, three_cp)
    assert w.shape[0] == Cin
    assert cp >= out_channels

    n_cores = _num_tensorcores_per_chip()
    b_pad = _round_up(B, 8)                     # sublane-align the batch axis (avoid masked stores)
    x_in = x if b_pad == B else jnp.pad(x, ((0, b_pad - B), (0, 0)))
    if tb is None:
        tb = _pick_tb(b_pad, n_cores)
    assert b_pad % tb == 0, (b_pad, tb)
    grid = (b_pad // tb,)

    itemsize = lambda dt: np.dtype(dt).itemsize
    bytes_accessed = (x_in.size * itemsize(x_in.dtype)
                      + w.size * itemsize(w.dtype)
                      + b.size * itemsize(b.dtype)
                      + b_pad * cp * itemsize(out_dtype))
    cost = pl.CostEstimate(flops=2 * b_pad * Cin * three_cp + 2 * b_pad * cp,
                           transcendentals=0,
                           bytes_accessed=bytes_accessed)

    out = pl.pallas_call(
        functools.partial(_style_split_kernel, cout_padded=cp),
        out_shape=jax.ShapeDtypeStruct((b_pad, cp), out_dtype),
        grid_spec=pltpu.PrefetchScalarGridSpec(
            num_scalar_prefetch=0,
            grid=grid,
            in_specs=[
                pl.BlockSpec((tb, Cin), lambda i: (i, 0)),           # x tile over batch
                pl.BlockSpec((Cin, three_cp), lambda i: (0, 0)),     # W: constant index -> VMEM-resident
                pl.BlockSpec((1, three_cp), lambda i: (0, 0)),       # b: constant index -> VMEM-resident
            ],
            out_specs=pl.BlockSpec((tb, cp), lambda i: (i, 0)),
        ),
        compiler_params=pltpu.CompilerParams(dimension_semantics=("parallel",)),
        cost_estimate=cost,
    )(x_in, w, b)

    if b_pad != B or cp != out_channels:
        out = out[:B, :out_channels]            # strip sublane/lane padding (only when misaligned)
    return out


# --------------------------- pure-JAX references ---------------------------

def _reference_f32(x_f32, w_pt, b_pt, lr_multiplier):
    """Exact PyTorch-semantics reference in f32 (no bf16 rounding)."""
    in_f = x_f32.shape[1]
    w_gain = lr_multiplier / float(np.sqrt(in_f))
    y = x_f32 @ (w_pt * w_gain).T + b_pt * lr_multiplier
    m1, m2, m3 = jnp.split(y, 3, axis=1)
    return m1 * m2 + m3


def _reference_bf16(x, w, b, out_channels):
    """Reference with the same bf16 operand/output rounding the kernel uses."""
    y = jnp.dot(x.astype(jnp.bfloat16), w, preferred_element_type=jnp.float32) + b
    m1, m2, m3 = jnp.split(y, 3, axis=1)
    return (m1 * m2 + m3)[:, :out_channels].astype(jnp.bfloat16)


if __name__ == "__main__":
    B, Cin, Cout = 256, 128, 128      # batch, in_channels, out_channels (lane-aligned demo shapes)
    LR_MULT = 1.0
    BIAS_INIT = 1.0                   # StyleGAN-T passes bias_init=1 to StyleSplit's FC layer

    key = jax.random.PRNGKey(0)
    kx, kw = jax.random.split(key, 2)

    # Upstream mapping-network FC is assumed to emit bf16 activations; generate x directly in
    # bf16 (no separate wrapper-side cast pass).
    x = jax.random.normal(kx, (B, Cin), dtype=jnp.float32).astype(jnp.bfloat16)

    # FullyConnectedLayer init (PyTorch convention): weight [3*out, in] = randn / lr_multiplier,
    # bias [3*out] = bias_init.
    w_pt = jax.random.normal(kw, (3 * Cout, Cin), dtype=jnp.float32) / LR_MULT
    b_pt = jnp.full((3 * Cout,), BIAS_INIT, dtype=jnp.float32)

    # One-time host-side param prep (gain folding + transpose + chunk padding + bf16 cast).
    w, b, cout, cp = prepare_style_split_params(w_pt, b_pt, lr_multiplier=LR_MULT)

    out = style_split_forward(x, w, b, out_channels=cout, cout_padded=cp)
    out = jax.block_until_ready(out)
    assert out.shape == (B, Cout), out.shape
    assert out.dtype == jnp.bfloat16, out.dtype

    # (1) Tight check vs a reference applying the same bf16 operand/output rounding.
    ref_bf16 = _reference_bf16(x, w, b, cout)
    np.testing.assert_allclose(np.asarray(out, np.float32), np.asarray(ref_bf16, np.float32),
                               rtol=2e-2, atol=2e-2)

    # (2) Loose check vs the exact f32 PyTorch semantics (slack from bf16 W/x/output rounding,
    #     amplified by the m1*m2 product).
    x_f32 = jnp.asarray(x, jnp.float32)
    ref_f32 = _reference_f32(x_f32, w_pt, b_pt, LR_MULT)
    np.testing.assert_allclose(np.asarray(out, np.float32), np.asarray(ref_f32),
                               rtol=5e-2, atol=3e-1)

    print("KERNEL_OK")
</pallas_src>

<mosaic_0001>
module attributes {stable_mosaic.version = 11 : i64} {
  func.func @_style_split_kernel(%arg0: i32, %arg1: memref<256x128xbf16, #tpu.memory_space<vmem>>, %arg2: memref<128x384xbf16, #tpu.memory_space<vmem>>, %arg3: memref<1x384xf32, #tpu.memory_space<vmem>>, %arg4: memref<256x128xbf16, #tpu.memory_space<vmem>>) attributes {dimension_semantics = [#tpu.dimension_semantics<parallel>], iteration_bounds = array<i64: 1>, scalar_prefetch = 0 : i64, scratch_operands = 0 : i64, tpu.core_type = #tpu.core_type<tc>, window_params = [{transform_indices = @transform_0, window_bounds = array<i64: 256, 128>}, {pipeline_mode = #tpu.pipeline_mode<synchronous>, transform_indices = @transform_1, window_bounds = array<i64: 128, 384>}, {pipeline_mode = #tpu.pipeline_mode<synchronous>, transform_indices = @transform_2, window_bounds = array<i64: 1, 384>}, {transform_indices = @transform_3, window_bounds = array<i64: 256, 128>}]} {
    %c0 = arith.constant 0 : index
    %c0_0 = arith.constant 0 : index
    %0 = vector.load %arg1[%c0, %c0_0] : memref<256x128xbf16, #tpu.memory_space<vmem>>, vector<256x128xbf16>
    %c0_1 = arith.constant 0 : index
    %c0_2 = arith.constant 0 : index
    %1 = vector.load %arg2[%c0_1, %c0_2] : memref<128x384xbf16, #tpu.memory_space<vmem>>, vector<128x384xbf16>
    %cst = arith.constant dense<0.000000e+00> : vector<256x384xf32>
    %2 = tpu.matmul %0, %1, %cst {dimension_numbers = #tpu.dot_dimension_numbers<[1], [0], [0], [1], [0, 0, 1, 1], [], []>} : vector<256x128xbf16>, vector<128x384xbf16>, vector<256x384xf32> -> vector<256x384xf32>
    %c0_3 = arith.constant 0 : index
    %c0_4 = arith.constant 0 : index
    %3 = vector.load %arg3[%c0_3, %c0_4] : memref<1x384xf32, #tpu.memory_space<vmem>>, vector<1x384xf32>
    %4 = vector.broadcast %3 : vector<1x384xf32> to vector<256x384xf32>
    %5 = arith.addf %2, %4 : vector<256x384xf32>
    %6 = vector.extract_strided_slice %5 {offsets = [0, 0], sizes = [256, 128], strides = [1, 1]} : vector<256x384xf32> to vector<256x128xf32>
    %7 = vector.extract_strided_slice %5 {offsets = [0, 128], sizes = [256, 128], strides = [1, 1]} : vector<256x384xf32> to vector<256x128xf32>
    %8 = vector.extract_strided_slice %5 {offsets = [0, 256], sizes = [256, 128], strides = [1, 1]} : vector<256x384xf32> to vector<256x128xf32>
    %9 = arith.mulf %6, %7 : vector<256x128xf32>
    %10 = arith.addf %9, %8 : vector<256x128xf32>
    %11 = arith.truncf %10 : vector<256x128xf32> to vector<256x128xbf16>
    %c0_5 = arith.constant 0 : index
    %c0_6 = arith.constant 0 : index
    %12 = vector.load %arg4[%c0_5, %c0_6] : memref<256x128xbf16, #tpu.memory_space<vmem>>, vector<256x128xbf16>
    tpu.vector_store %arg4[%c0_5, %c0_6], %11 {strides = array<i32>} : memref<256x128xbf16, #tpu.memory_space<vmem>>, vector<256x128xbf16>,
    return
  }
  func.func @transform_0(%arg0: i32) -> (i32, i32) {
    %c0_i32 = arith.constant 0 : i32
    %c0_i32_0 = arith.constant 0 : i32
    return %arg0, %c0_i32 : i32, i32
  }
  func.func @transform_1(%arg0: i32) -> (i32, i32) {
    %c0_i32 = arith.constant 0 : i32
    %c0_i32_0 = arith.constant 0 : i32
    %c0_i32_1 = arith.constant 0 : i32
    return %c0_i32, %c0_i32_0 : i32, i32
  }
  func.func @transform_2(%arg0: i32) -> (i32, i32) {
    %c0_i32 = arith.constant 0 : i32
    %c0_i32_0 = arith.constant 0 : i32
    %c0_i32_1 = arith.constant 0 : i32
    return %c0_i32, %c0_i32_0 : i32, i32
  }
  func.func @transform_3(%arg0: i32) -> (i32, i32) {
    %c0_i32 = arith.constant 0 : i32
    %c0_i32_0 = arith.constant 0 : i32
    return %arg0, %c0_i32 : i32, i32
  }
}

</mosaic_0001>

<llo_original>
// kernel: tpu_custom_call.1
$region0: #{tpu_custom_call.1}
  #allocation0 [shape = 'u32[]', space=smem, size = 0x4, offset = 0x4, fixed_abs, tag = 'smem constant byte address 0x4 - core index']
  #allocation1 [shape = 'u32[72,128]{1,0:T(1,128)}', space=vmem, size = 0x9000, scoped, tag = 'internal scratch']
  %s0 = inlined_call_operand.hbm [shape: bf16[256,128], index: 0, kind: input, shape index: {}]
  %s1 = inlined_call_operand.hbm [shape: bf16[128,384], index: 1, kind: input, shape index: {}]
  %s2 = inlined_call_operand.hbm [shape: f32[1,384], index: 2, kind: input, shape index: {}]
  %s3 = inlined_call_operand.hbm [shape: bf16[256,128], index: 3, kind: output, shape index: {}]
  %s4 = sld [smem:[#allocation0]]
  $region34: #{tpu_custom_call.1} parent=0
    _
  %s6 = ssub.s32 1, %s4
  %s7 = scalar_select 0, %s6, %s4
  $region1: #{tpu_custom_call.1} parent=0
    #allocation2 [shape = 'u8[65536]{0}', space=vmem, size = 0x10000, scoped, tag = 'input window, operand 0, single buffered']
    #allocation3 [shape = 's32[1]{0}', space=sflag, size = 0x4, scoped, tag = 'scoped memory for tpu_custom_call.1']
    #allocation4 [shape = 's32[1]{0}', space=sflag, size = 0x4, scoped, tag = 'scoped memory for tpu_custom_call.1']
    #allocation5 [shape = 'u8[98304]{0}', space=vmem, size = 0x18000, scoped, tag = 'input window, operand 1, single buffered']
    #allocation6 [shape = 's32[1]{0}', space=sflag, size = 0x4, scoped, tag = 'scoped memory for tpu_custom_call.1']
    #allocation7 [shape = 'u8[1536]{0}', space=vmem, size = 0x800, scoped, tag = 'input window, operand 2, single buffered']
    #allocation8 [shape = 'u8[65536]{0}', space=vmem, size = 0x10000, scoped, tag = 'output window, operand 0, single buffered']
    %8 = vsyncpa [#allocation3], 0
    %9 = vsyncpa [#allocation6], 0
    %10 = vsyncpa [#allocation4], 0
    // Predicated region
    $region2: #{tpu_custom_call.1} parent=1 // pred_check
      _
    $region3: #{tpu_custom_call.1} parent=1 // pred_check_branch
      %12 = sbr.rel (0) target = $region5
    $region4: #{tpu_custom_call.1} parent=1 // pred_region
      %14 = vsyncadd [#allocation3], 0
      %s15 = sshll.u32 %s0, 4
      %s16 = int_to_ptr.hbm [resolvable:$true] %s15
      %s17 = sshll.u32 [#allocation2], 4
      %s18 = int_to_ptr.vmem [resolvable:$true] %s17
      %23 = dma.hbm_to_vmem [thread:$0]  %s16, 2048, %s18, [#allocation3], 64, 64, 4
    $region5: #{tpu_custom_call.1} parent=1 // pred_fallthru
      _
    // Predicated region
    $region6: #{tpu_custom_call.1} parent=1 // pred_check
      _
    $region7: #{tpu_custom_call.1} parent=1 // pred_check_branch
      %25 = sbr.rel (0) target = $region9
    $region8: #{tpu_custom_call.1} parent=1 // pred_region
      %27 = vsyncadd [#allocation6], 0
      %s28 = sshll.u32 %s1, 4
      %s29 = int_to_ptr.hbm [resolvable:$true] %s28
      %s30 = sshll.u32 [#allocation5], 4
      %s31 = int_to_ptr.vmem [resolvable:$true] %s30
      %36 = dma.hbm_to_vmem [thread:$0]  %s29, 3072, %s31, [#allocation6], 192, 192, 12
    $region9: #{tpu_custom_call.1} parent=1 // pred_fallthru
      _
    // Predicated region
    $region10: #{tpu_custom_call.1} parent=1 // pred_check
      _
    $region11: #{tpu_custom_call.1} parent=1 // pred_check_branch
      %38 = sbr.rel (0) target = $region13
    $region12: #{tpu_custom_call.1} parent=1 // pred_region
      %40 = vsyncadd [#allocation6], 0
      %s42 = sshll.u32 %s2, 4
      %s43 = int_to_ptr.hbm [resolvable:$true] %s42
      %s44 = sshll.u32 [#allocation7], 4
      %s45 = int_to_ptr.vmem [resolvable:$true] %s44
      %47 = dma.hbm_to_vmem [thread:$0]  %s43, 48, %s45, [#allocation6]
    $region13: #{tpu_custom_call.1} parent=1 // pred_fallthru
      _
    // Predicated region
    $region14: #{tpu_custom_call.1} parent=1 // pred_check
      _
    $region15: #{tpu_custom_call.1} parent=1 // pred_check_branch
      %49 = sbr.rel (0) target = $region17
    $region16: #{tpu_custom_call.1} parent=1 // pred_region
      %51 = dma.done [#allocation3], 2048
    $region17: #{tpu_custom_call.1} parent=1 // pred_fallthru
      _
    // Predicated region
    $region18: #{tpu_custom_call.1} parent=1 // pred_check
      _
    $region19: #{tpu_custom_call.1} parent=1 // pred_check_branch
      %53 = sbr.rel (0) target = $region21
    $region20: #{tpu_custom_call.1} parent=1 // pred_region
      %55 = dma.done [#allocation6], 3072
    $region21: #{tpu_custom_call.1} parent=1 // pred_fallthru
      _
    // Predicated region
    $region22: #{tpu_custom_call.1} parent=1 // pred_check
      _
    $region23: #{tpu_custom_call.1} parent=1 // pred_check_branch
      %57 = sbr.rel (0) target = $region25
    $region24: #{tpu_custom_call.1} parent=1 // pred_region
      %59 = dma.done [#allocation6], 48
    $region25: #{tpu_custom_call.1} parent=1 // pred_fallthru
      _
    %v60 = vld [vmem:[#allocation2] sm:$0xf]
    %v61 = vld [vmem:[#allocation2 + $0x4] sm:$0xf]
    %v62 = vld [vmem:[#allocation2 + $0x8] sm:$0xf]
    %v63 = vld [vmem:[#allocation2 + $0xc] sm:$0xf]
    %v64 = vld [vmem:[#allocation2 + $0x10] sm:$0xf]
    %v65 = vld [vmem:[#allocation2 + $0x14] sm:$0xf]
    %v66 = vld [vmem:[#allocation2 + $0x18] sm:$0xf]
    %v67 = vld [vmem:[#allocation2 + $0x1c] sm:$0xf]
    %v68 = vld [vmem:[#allocation2 + $0x20] sm:$0xf]
    %v69 = vld [vmem:[#allocation2 + $0x24] sm:$0xf]
    %v70 = vld [vmem:[#allocation2 + $0x28] sm:$0xf]
    %v71 = vld [vmem:[#allocation2 + $0x2c] sm:$0xf]
    %v72 = vld [vmem:[#allocation2 + $0x30] sm:$0xf]
    %v73 = vld [vmem:[#allocation2 + $0x34] sm:$0xf]
    %v74 = vld [vmem:[#allocation2 + $0x38] sm:$0xf]
    %v75 = vld [vmem:[#allocation2 + $0x3c] sm:$0xf]
    %v76 = vld [vmem:[#allocation2 + $0x40] sm:$0xf]
    %v77 = vld [vmem:[#allocation2 + $0x44] sm:$0xf]
    %v78 = vld [vmem:[#allocation2 + $0x48] sm:$0xf]
    %v79 = vld [vmem:[#allocation2 + $0x4c] sm:$0xf]
    %v80 = vld [vmem:[#allocation2 + $0x50] sm:$0xf]
    %v81 = vld [vmem:[#allocation2 + $0x54] sm:$0xf]
    %v82 = vld [vmem:[#allocation2 + $0x58] sm:$0xf]
    %v83 = vld [vmem:[#allocation2 + $0x5c] sm:$0xf]
    %v84 = vld [vmem:[#allocation2 + $0x60] sm:$0xf]
    %v85 = vld [vmem:[#allocation2 + $0x64] sm:$0xf]
    %v86 = vld [vmem:[#allocation2 + $0x68] sm:$0xf]
    %v87 = vld [vmem:[#allocation2 + $0x6c] sm:$0xf]
    %v88 = vld [vmem:[#allocation2 + $0x70] sm:$0xf]
    %v89 = vld [vmem:[#allocation2 + $0x74] sm:$0xf]
    %v90 = vld [vmem:[#allocation2 + $0x78] sm:$0xf]
    %v91 = vld [vmem:[#allocation2 + $0x7c] sm:$0xf]
    %v92 = vld [vmem:[#allocation5] sm:$0xff]
    %v93 = vld [vmem:[#allocation5 + $0x8] sm:$0xf]
    %v94 = vld [vmem:[#allocation5 + $0xc] sm:$0xff]
    %v95 = vld [vmem:[#allocation5 + $0x14] sm:$0xf]
    %v96 = vld [vmem:[#allocation5 + $0x18] sm:$0xff]
    %v97 = vld [vmem:[#allocation5 + $0x20] sm:$0xf]
    %v98 = vld [vmem:[#allocation5 + $0x24] sm:$0xff]
    %v99 = vld [vmem:[#allocation5 + $0x2c] sm:$0xf]
    %v100 = vld [vmem:[#allocation5 + $0x30] sm:$0xff]
    %v101 = vld [vmem:[#allocation5 + $0x38] sm:$0xf]
    %v102 = vld [vmem:[#allocation5 + $0x3c] sm:$0xff]
    %v103 = vld [vmem:[#allocation5 + $0x44] sm:$0xf]
    %v104 = vld [vmem:[#allocation5 + $0x48] sm:$0xff]
    %v105 = vld [vmem:[#allocation5 + $0x50] sm:$0xf]
    %v106 = vld [vmem:[#allocation5 + $0x54] sm:$0xff]
    %v107 = vld [vmem:[#allocation5 + $0x5c] sm:$0xf]
    %v108 = vld [vmem:[#allocation5 + $0x60] sm:$0xff]
    %v109 = vld [vmem:[#allocation5 + $0x68] sm:$0xf]
    %v110 = vld [vmem:[#allocation5 + $0x6c] sm:$0xff]
    %v111 = vld [vmem:[#allocation5 + $0x74] sm:$0xf]
    %v112 = vld [vmem:[#allocation5 + $0x78] sm:$0xff]
    %v113 = vld [vmem:[#allocation5 + $0x80] sm:$0xf]
    %v114 = vld [vmem:[#allocation5 + $0x84] sm:$0xff]
    %v115 = vld [vmem:[#allocation5 + $0x8c] sm:$0xf]
    %v116 = vld [vmem:[#allocation5 + $0x90] sm:$0xff]
    %v117 = vld [vmem:[#allocation5 + $0x98] sm:$0xf]
    %v118 = vld [vmem:[#allocation5 + $0x9c] sm:$0xff]
    %v119 = vld [vmem:[#allocation5 + $0xa4] sm:$0xf]
    %v120 = vld [vmem:[#allocation5 + $0xa8] sm:$0xff]
    %v121 = vld [vmem:[#allocation5 + $0xb0] sm:$0xf]
    %v122 = vld [vmem:[#allocation5 + $0xb4] sm:$0xff]
    %v123 = vld [vmem:[#allocation5 + $0xbc] sm:$0xf]
    %v124 = vld [vmem:[#allocation7] sm:$0x7]
    %v126 = vperm.slane %v124, 0
    %v127 = vperm.slane %v124, 1
    %v128 = vperm.slane %v124, 2
    %v164 = vunpack.c.l.b16 %v60
    %v165 = vunpack.c.l.b16 %v61
    %v166 = vunpack.c.l.b16 %v62
    %v167 = vunpack.c.l.b16 %v63
    %v168 = vunpack.c.l.b16 %v64
    %v169 = vunpack.c.l.b16 %v65
    %v170 = vunpack.c.l.b16 %v66
    %v171 = vunpack.c.l.b16 %v67
    %v172 = vunpack.c.l.b16 %v68
    %v173 = vunpack.c.l.b16 %v69
    %v174 = vunpack.c.l.b16 %v70
    %v175 = vunpack.c.l.b16 %v71
    %v176 = vunpack.c.l.b16 %v72
    %v177 = vunpack.c.l.b16 %v73
    %v178 = vunpack.c.l.b16 %v74
    %v179 = vunpack.c.l.b16 %v75
    %v180 = vunpack.c.l.b16 %v76
    %v181 = vunpack.c.l.b16 %v77
    %v182 = vunpack.c.l.b16 %v78
    %v183 = vunpack.c.l.b16 %v79
    %v184 = vunpack.c.l.b16 %v80
    %v185 = vunpack.c.l.b16 %v81
    %v186 = vunpack.c.l.b16 %v82
    %v187 = vunpack.c.l.b16 %v83
    %v188 = vunpack.c.l.b16 %v84
    %v189 = vunpack.c.l.b16 %v85
    %v190 = vunpack.c.l.b16 %v86
    %v191 = vunpack.c.l.b16 %v87
    %v192 = vunpack.c.l.b16 %v88
    %v193 = vunpack.c.l.b16 %v89
    %v194 = vunpack.c.l.b16 %v90
    %v195 = vunpack.c.l.b16 %v91
    %v196 = vpack.c.b16 %v165, %v164
    %v197 = vpack.c.b16 %v167, %v166
    %v198 = vpack.c.b16 %v169, %v168
    %v199 = vpack.c.b16 %v171, %v170
    %v200 = vpack.c.b16 %v173, %v172
    %v201 = vpack.c.b16 %v175, %v174
    %v202 = vpack.c.b16 %v177, %v176
    %v203 = vpack.c.b16 %v179, %v178
    %v204 = vpack.c.b16 %v181, %v180
    %v205 = vpack.c.b16 %v183, %v182
    %v206 = vpack.c.b16 %v185, %v184
    %v207 = vpack.c.b16 %v187, %v186
    %v208 = vpack.c.b16 %v189, %v188
    %v209 = vpack.c.b16 %v191, %v190
    %v210 = vpack.c.b16 %v193, %v192
    %v211 = vpack.c.b16 %v195, %v194
    %v260 = vunpack.c.l.b16 %v92
    %v261 = vunpack.c.h.b16 %v92
    %v262 = vunpack.c.l.b16 %v93
    %v263 = vunpack.c.l.b16 %v94
    %v264 = vunpack.c.h.b16 %v94
    %v265 = vunpack.c.l.b16 %v95
    %v266 = vunpack.c.l.b16 %v96
    %v267 = vunpack.c.h.b16 %v96
    %v268 = vunpack.c.l.b16 %v97
    %v269 = vunpack.c.l.b16 %v98
    %v270 = vunpack.c.h.b16 %v98
    %v271 = vunpack.c.l.b16 %v99
    %v272 = vunpack.c.l.b16 %v100
    %v273 = vunpack.c.h.b16 %v100
    %v274 = vunpack.c.l.b16 %v101
    %v275 = vunpack.c.l.b16 %v102
    %v276 = vunpack.c.h.b16 %v102
    %v277 = vunpack.c.l.b16 %v103
    %v278 = vunpack.c.l.b16 %v104
    %v279 = vunpack.c.h.b16 %v104
    %v280 = vunpack.c.l.b16 %v105
    %v281 = vunpack.c.l.b16 %v106
    %v282 = vunpack.c.h.b16 %v106
    %v283 = vunpack.c.l.b16 %v107
    %v284 = vunpack.c.l.b16 %v108
    %v285 = vunpack.c.h.b16 %v108
    %v286 = vunpack.c.l.b16 %v109
    %v287 = vunpack.c.l.b16 %v110
    %v288 = vunpack.c.h.b16 %v110
    %v289 = vunpack.c.l.b16 %v111
    %v290 = vunpack.c.l.b16 %v112
    %v291 = vunpack.c.h.b16 %v112
    %v292 = vunpack.c.l.b16 %v113
    %v293 = vunpack.c.l.b16 %v114
    %v294 = vunpack.c.h.b16 %v114
    %v295 = vunpack.c.l.b16 %v115
    %v296 = vunpack.c.l.b16 %v116
    %v297 = vunpack.c.h.b16 %v116
    %v298 = vunpack.c.l.b16 %v117
    %v299 = vunpack.c.l.b16 %v118
    %v300 = vunpack.c.h.b16 %v118
    %v301 = vunpack.c.l.b16 %v119
    %v302 = vunpack.c.l.b16 %v120
    %v303 = vunpack.c.h.b16 %v120
    %v304 = vunpack.c.l.b16 %v121
    %v305 = vunpack.c.l.b16 %v122
    %v306 = vunpack.c.h.b16 %v122
    %v307 = vunpack.c.l.b16 %v123
    %v308 = vpack.c.b16 %v263, %v260
    %v309 = vpack.c.b16 %v264, %v261
    %v310 = vpack.c.b16 %v265, %v262
    %v311 = vpack.c.b16 %v269, %v266
    %v312 = vpack.c.b16 %v270, %v267
    %v313 = vpack.c.b16 %v271, %v268
    %v314 = vpack.c.b16 %v275, %v272
    %v315 = vpack.c.b16 %v276, %v273
    %v316 = vpack.c.b16 %v277, %v274
    %v317 = vpack.c.b16 %v281, %v278
    %v318 = vpack.c.b16 %v282, %v279
    %v319 = vpack.c.b16 %v283, %v280
    %v320 = vpack.c.b16 %v287, %v284
    %v321 = vpack.c.b16 %v288, %v285
    %v322 = vpack.c.b16 %v289, %v286
    %v323 = vpack.c.b16 %v293, %v290
    %v324 = vpack.c.b16 %v294, %v291
    %v325 = vpack.c.b16 %v295, %v292
    %v326 = vpack.c.b16 %v299, %v296
    %v327 = vpack.c.b16 %v300, %v297
    %v328 = vpack.c.b16 %v301, %v298
    %v329 = vpack.c.b16 %v305, %v302
    %v330 = vpack.c.b16 %v306, %v303
    %v331 = vpack.c.b16 %v307, %v304
    %356 = vmatpush.bf16.msra.mxu0 %v329
    %357 = vmatpush.bf16.msra.mxu0 %v326
    %358 = vmatpush.bf16.msra.mxu0 %v323
    %359 = vmatpush.bf16.msra.mxu0 %v320
    %360 = vmatpush.bf16.msra.mxu0 %v317
    %361 = vmatpush.bf16.msra.mxu0 %v314
    %362 = vmatpush.bf16.msra.mxu0 %v311
    %363 = vmatpush.bf16.msra.mxu0 %v308
    %364 = vmatmul.bf16.gmra.mxu0 %v196
    %v365 = vpop.f32.mrf.mxu0
    %v366 = vadd.f32 %v126, %v365
    %v367 = vpop.f32.mrf.mxu0
    %v368 = vadd.f32 %v126, %v367
    %369 = vmatmul.bf16.gmra.mxu0 %v197
    %v370 = vpop.f32.mrf.mxu0
    %v371 = vadd.f32 %v126, %v370
    %v372 = vpop.f32.mrf.mxu0
    %v373 = vadd.f32 %v126, %v372
    %374 = vmatmul.bf16.gmra.mxu0 %v198
    %v375 = vpop.f32.mrf.mxu0
    %v376 = vadd.f32 %v126, %v375
    %v377 = vpop.f32.mrf.mxu0
    %v378 = vadd.f32 %v126, %v377
    %379 = vmatmul.bf16.gmra.mxu0 %v199
    %v380 = vpop.f32.mrf.mxu0
    %v381 = vadd.f32 %v126, %v380
    %v382 = vpop.f32.mrf.mxu0
    %v383 = vadd.f32 %v126, %v382
    %384 = vmatmul.bf16.gmra.mxu0 %v200
    %v385 = vpop.f32.mrf.mxu0
    %v386 = vadd.f32 %v126, %v385
    %v387 = vpop.f32.mrf.mxu0
    %v388 = vadd.f32 %v126, %v387
    %389 = vmatmul.bf16.gmra.mxu0 %v201
    %v390 = vpop.f32.mrf.mxu0
    %v391 = vadd.f32 %v126, %v390
    %v392 = vpop.f32.mrf.mxu0
    %v393 = vadd.f32 %v126, %v392
    %394 = vmatmul.bf16.gmra.mxu0 %v202
    %v395 = vpop.f32.mrf.mxu0
    %v396 = vadd.f32 %v126, %v395
    %v397 = vpop.f32.mrf.mxu0
    %v398 = vadd.f32 %v126, %v397
    %399 = vmatmul.bf16.gmra.mxu0 %v203
    %v400 = vpop.f32.mrf.mxu0
    %v401 = vadd.f32 %v126, %v400
    %v402 = vpop.f32.mrf.mxu0
    %v403 = vadd.f32 %v126, %v402
    %404 = vmatmul.bf16.gmra.mxu0 %v204
    %v405 = vpop.f32.mrf.mxu0
    %v406 = vadd.f32 %v126, %v405
    %v407 = vpop.f32.mrf.mxu0
    %v408 = vadd.f32 %v126, %v407
    %409 = vmatmul.bf16.gmra.mxu0 %v205
    %v410 = vpop.f32.mrf.mxu0
    %v411 = vadd.f32 %v126, %v410
    %v412 = vpop.f32.mrf.mxu0
    %v413 = vadd.f32 %v126, %v412
    %414 = vmatmul.bf16.gmra.mxu0 %v206
    %v415 = vpop.f32.mrf.mxu0
    %v416 = vadd.f32 %v126, %v415
    %v417 = vpop.f32.mrf.mxu0
    %v418 = vadd.f32 %v126, %v417
    %419 = vmatmul.bf16.gmra.mxu0 %v207
    %v420 = vpop.f32.mrf.mxu0
    %v421 = vadd.f32 %v126, %v420
    %v422 = vpop.f32.mrf.mxu0
    %v423 = vadd.f32 %v126, %v422
    %424 = vmatmul.bf16.gmra.mxu0 %v208
    %v425 = vpop.f32.mrf.mxu0
    %v426 = vadd.f32 %v126, %v425
    %v427 = vpop.f32.mrf.mxu0
    %v428 = vadd.f32 %v126, %v427
    %429 = vmatmul.bf16.gmra.mxu0 %v209
    %v430 = vpop.f32.mrf.mxu0
    %v431 = vadd.f32 %v126, %v430
    %v432 = vpop.f32.mrf.mxu0
    %v433 = vadd.f32 %v126, %v432
    %434 = vmatmul.bf16.gmra.mxu0 %v210
    %v435 = vpop.f32.mrf.mxu0
    %v436 = vadd.f32 %v126, %v435
    %v437 = vpop.f32.mrf.mxu0
    %v438 = vadd.f32 %v126, %v437
    %439 = vmatmul.bf16.gmra.mxu0 %v211
    %v440 = vpop.f32.mrf.mxu0
    %v441 = vadd.f32 %v126, %v440
    %v442 = vpop.f32.mrf.mxu0
    %v443 = vadd.f32 %v126, %v442
    %444 = vdwg.mxu0
    %445 = vmatpush.bf16.msra.mxu0 %v330
    %446 = vmatpush.bf16.msra.mxu0 %v327
    %447 = vmatpush.bf16.msra.mxu0 %v324
    %448 = vmatpush.bf16.msra.mxu0 %v321
    %449 = vmatpush.bf16.msra.mxu0 %v318
    %450 = vmatpush.bf16.msra.mxu0 %v315
    %451 = vmatpush.bf16.msra.mxu0 %v312
    %452 = vmatpush.bf16.msra.mxu0 %v309
    %453 = vmatmul.bf16.gmra.mxu0 %v196
    %v454 = vpop.f32.mrf.mxu0
    %v455 = vadd.f32 %v127, %v454
    %v456 = vpop.f32.mrf.mxu0
    %v457 = vadd.f32 %v127, %v456
    %458 = vmatmul.bf16.gmra.mxu0 %v197
    %v459 = vpop.f32.mrf.mxu0
    %v460 = vadd.f32 %v127, %v459
    %v461 = vpop.f32.mrf.mxu0
    %v462 = vadd.f32 %v127, %v461
    %463 = vmatmul.bf16.gmra.mxu0 %v198
    %v464 = vpop.f32.mrf.mxu0
    %v465 = vadd.f32 %v127, %v464
    %v466 = vpop.f32.mrf.mxu0
    %v467 = vadd.f32 %v127, %v466
    %468 = vmatmul.bf16.gmra.mxu0 %v199
    %v469 = vpop.f32.mrf.mxu0
    %v470 = vadd.f32 %v127, %v469
    %v471 = vpop.f32.mrf.mxu0
    %v472 = vadd.f32 %v127, %v471
    %473 = vmatmul.bf16.gmra.mxu0 %v200
    %v474 = vpop.f32.mrf.mxu0
    %v475 = vadd.f32 %v127, %v474
    %v476 = vpop.f32.mrf.mxu0
    %v477 = vadd.f32 %v127, %v476
    %478 = vmatmul.bf16.gmra.mxu0 %v201
    %v479 = vpop.f32.mrf.mxu0
    %v480 = vadd.f32 %v127, %v479
    %v481 = vpop.f32.mrf.mxu0
    %v482 = vadd.f32 %v127, %v481
    %483 = vmatmul.bf16.gmra.mxu0 %v202
    %v484 = vpop.f32.mrf.mxu0
    %v485 = vadd.f32 %v127, %v484
    %v486 = vpop.f32.mrf.mxu0
    %v487 = vadd.f32 %v127, %v486
    %488 = vmatmul.bf16.gmra.mxu0 %v203
    %v489 = vpop.f32.mrf.mxu0
    %v490 = vadd.f32 %v127, %v489
    %v491 = vpop.f32.mrf.mxu0
    %v492 = vadd.f32 %v127, %v491
    %493 = vmatmul.bf16.gmra.mxu0 %v204
    %v494 = vpop.f32.mrf.mxu0
    %v495 = vadd.f32 %v127, %v494
    %v496 = vpop.f32.mrf.mxu0
    %v497 = vadd.f32 %v127, %v496
    %498 = vmatmul.bf16.gmra.mxu0 %v205
    %v499 = vpop.f32.mrf.mxu0
    %v500 = vadd.f32 %v127, %v499
    %v501 = vpop.f32.mrf.mxu0
    %v502 = vadd.f32 %v127, %v501
    %503 = vmatmul.bf16.gmra.mxu0 %v206
    %v504 = vpop.f32.mrf.mxu0
    %v505 = vadd.f32 %v127, %v504
    %v506 = vpop.f32.mrf.mxu0
    %v507 = vadd.f32 %v127, %v506
    %508 = vmatmul.bf16.gmra.mxu0 %v207
    %v509 = vpop.f32.mrf.mxu0
    %v510 = vadd.f32 %v127, %v509
    %v511 = vpop.f32.mrf.mxu0
    %v512 = vadd.f32 %v127, %v511
    %513 = vmatmul.bf16.gmra.mxu0 %v208
    %v514 = vpop.f32.mrf.mxu0
    %v515 = vadd.f32 %v127, %v514
    %v516 = vpop.f32.mrf.mxu0
    %v517 = vadd.f32 %v127, %v516
    %518 = vmatmul.bf16.gmra.mxu0 %v209
    %v519 = vpop.f32.mrf.mxu0
    %v520 = vadd.f32 %v127, %v519
    %v521 = vpop.f32.mrf.mxu0
    %v522 = vadd.f32 %v127, %v521
    %523 = vmatmul.bf16.gmra.mxu0 %v210
    %v524 = vpop.f32.mrf.mxu0
    %v525 = vadd.f32 %v127, %v524
    %v526 = vpop.f32.mrf.mxu0
    %v527 = vadd.f32 %v127, %v526
    %528 = vmatmul.bf16.gmra.mxu0 %v211
    %v529 = vpop.f32.mrf.mxu0
    %v530 = vadd.f32 %v127, %v529
    %v531 = vpop.f32.mrf.mxu0
    %v532 = vadd.f32 %v127, %v531
    %533 = vdwg.mxu0
    %534 = vmatpush.bf16.msra.mxu0 %v331
    %535 = vmatpush.bf16.msra.mxu0 %v328
    %536 = vmatpush.bf16.msra.mxu0 %v325
    %537 = vmatpush.bf16.msra.mxu0 %v322
    %538 = vmatpush.bf16.msra.mxu0 %v319
    %539 = vmatpush.bf16.msra.mxu0 %v316
    %540 = vmatpush.bf16.msra.mxu0 %v313
    %541 = vmatpush.bf16.msra.mxu0 %v310
    %542 = vmatmul.bf16.gmra.mxu0 %v196
    %v543 = vpop.f32.mrf.mxu0
    %v544 = vadd.f32 %v128, %v543
    %v545 = vpop.f32.mrf.mxu0
    %v546 = vadd.f32 %v128, %v545
    %547 = vmatmul.bf16.gmra.mxu0 %v197
    %v548 = vpop.f32.mrf.mxu0
    %v549 = vadd.f32 %v128, %v548
    %v550 = vpop.f32.mrf.mxu0
    %v551 = vadd.f32 %v128, %v550
    %552 = vmatmul.bf16.gmra.mxu0 %v198
    %v553 = vpop.f32.mrf.mxu0
    %v554 = vadd.f32 %v128, %v553
    %v555 = vpop.f32.mrf.mxu0
    %v556 = vadd.f32 %v128, %v555
    %557 = vmatmul.bf16.gmra.mxu0 %v199
    %v558 = vpop.f32.mrf.mxu0
    %v559 = vadd.f32 %v128, %v558
    %v560 = vpop.f32.mrf.mxu0
    %v561 = vadd.f32 %v128, %v560
    %562 = vmatmul.bf16.gmra.mxu0 %v200
    %v563 = vpop.f32.mrf.mxu0
    %v564 = vadd.f32 %v128, %v563
    %v565 = vpop.f32.mrf.mxu0
    %v566 = vadd.f32 %v128, %v565
    %567 = vmatmul.bf16.gmra.mxu0 %v201
    %v568 = vpop.f32.mrf.mxu0
    %v569 = vadd.f32 %v128, %v568
    %v570 = vpop.f32.mrf.mxu0
    %v571 = vadd.f32 %v128, %v570
    %572 = vmatmul.bf16.gmra.mxu0 %v202
    %v573 = vpop.f32.mrf.mxu0
    %v574 = vadd.f32 %v128, %v573
    %v575 = vpop.f32.mrf.mxu0
    %v576 = vadd.f32 %v128, %v575
    %577 = vmatmul.bf16.gmra.mxu0 %v203
    %v578 = vpop.f32.mrf.mxu0
    %v579 = vadd.f32 %v128, %v578
    %v580 = vpop.f32.mrf.mxu0
    %v581 = vadd.f32 %v128, %v580
    %582 = vmatmul.bf16.gmra.mxu0 %v204
    %v583 = vpop.f32.mrf.mxu0
    %v584 = vadd.f32 %v128, %v583
    %v585 = vpop.f32.mrf.mxu0
    %v586 = vadd.f32 %v128, %v585
    %587 = vmatmul.bf16.gmra.mxu0 %v205
    %v588 = vpop.f32.mrf.mxu0
    %v589 = vadd.f32 %v128, %v588
    %v590 = vpop.f32.mrf.mxu0
    %v591 = vadd.f32 %v128, %v590
    %592 = vmatmul.bf16.gmra.mxu0 %v206
    %v593 = vpop.f32.mrf.mxu0
    %v594 = vadd.f32 %v128, %v593
    %v595 = vpop.f32.mrf.mxu0
    %v596 = vadd.f32 %v128, %v595
    %597 = vmatmul.bf16.gmra.mxu0 %v207
    %v598 = vpop.f32.mrf.mxu0
    %v599 = vadd.f32 %v128, %v598
    %v600 = vpop.f32.mrf.mxu0
    %v601 = vadd.f32 %v128, %v600
    %602 = vmatmul.bf16.gmra.mxu0 %v208
    %v603 = vpop.f32.mrf.mxu0
    %v604 = vadd.f32 %v128, %v603
    %v605 = vpop.f32.mrf.mxu0
    %v606 = vadd.f32 %v128, %v605
    %607 = vmatmul.bf16.gmra.mxu0 %v209
    %v608 = vpop.f32.mrf.mxu0
    %v609 = vadd.f32 %v128, %v608
    %v610 = vpop.f32.mrf.mxu0
    %v611 = vadd.f32 %v128, %v610
    %612 = vmatmul.bf16.gmra.mxu0 %v210
    %v613 = vpop.f32.mrf.mxu0
    %v614 = vadd.f32 %v128, %v613
    %v615 = vpop.f32.mrf.mxu0
    %v616 = vadd.f32 %v128, %v615
    %617 = vmatmul.bf16.gmra.mxu0 %v211
    %v618 = vpop.f32.mrf.mxu0
    %v619 = vadd.f32 %v128, %v618
    %v620 = vpop.f32.mrf.mxu0
    %v621 = vadd.f32 %v128, %v620
    %622 = vdwg.mxu0
    %v623 = vmul.f32 %v366, %v455
    %v624 = vmul.f32 %v368, %v457
    %v625 = vmul.f32 %v371, %v460
    %v626 = vmul.f32 %v373, %v462
    %v627 = vmul.f32 %v376, %v465
    %v628 = vmul.f32 %v378, %v467
    %v629 = vmul.f32 %v381, %v470
    %v630 = vmul.f32 %v383, %v472
    %v631 = vmul.f32 %v386, %v475
    %v632 = vmul.f32 %v388, %v477
    %v633 = vmul.f32 %v391, %v480
    %v634 = vmul.f32 %v393, %v482
    %v635 = vmul.f32 %v396, %v485
    %v636 = vmul.f32 %v398, %v487
    %v637 = vmul.f32 %v401, %v490
    %v638 = vmul.f32 %v403, %v492
    %v639 = vmul.f32 %v406, %v495
    %v640 = vmul.f32 %v408, %v497
    %v641 = vmul.f32 %v411, %v500
    %v642 = vmul.f32 %v413, %v502
    %v643 = vmul.f32 %v416, %v505
    %v644 = vmul.f32 %v418, %v507
    %v645 = vmul.f32 %v421, %v510
    %v646 = vmul.f32 %v423, %v512
    %v647 = vmul.f32 %v426, %v515
    %v648 = vmul.f32 %v428, %v517
    %v649 = vmul.f32 %v431, %v520
    %v650 = vmul.f32 %v433, %v522
    %v651 = vmul.f32 %v436, %v525
    %v652 = vmul.f32 %v438, %v527
    %v653 = vmul.f32 %v441, %v530
    %v654 = vmul.f32 %v443, %v532
    %v655 = vadd.f32 %v623, %v544
    %v656 = vadd.f32 %v624, %v546
    %v657 = vadd.f32 %v625, %v549
    %v658 = vadd.f32 %v626, %v551
    %v659 = vadd.f32 %v627, %v554
    %v660 = vadd.f32 %v628, %v556
    %v661 = vadd.f32 %v629, %v559
    %v662 = vadd.f32 %v630, %v561
    %v663 = vadd.f32 %v631, %v564
    %v664 = vadd.f32 %v632, %v566
    %v665 = vadd.f32 %v633, %v569
    %v666 = vadd.f32 %v634, %v571
    %v667 = vadd.f32 %v635, %v574
    %v668 = vadd.f32 %v636, %v576
    %v669 = vadd.f32 %v637, %v579
    %v670 = vadd.f32 %v638, %v581
    %v671 = vadd.f32 %v639, %v584
    %v672 = vadd.f32 %v640, %v586
    %v673 = vadd.f32 %v641, %v589
    %v674 = vadd.f32 %v642, %v591
    %v675 = vadd.f32 %v643, %v594
    %v676 = vadd.f32 %v644, %v596
    %v677 = vadd.f32 %v645, %v599
    %v678 = vadd.f32 %v646, %v601
    %v679 = vadd.f32 %v647, %v604
    %v680 = vadd.f32 %v648, %v606
    %v681 = vadd.f32 %v649, %v609
    %v682 = vadd.f32 %v650, %v611
    %v683 = vadd.f32 %v651, %v614
    %v684 = vadd.f32 %v652, %v616
    %v685 = vadd.f32 %v653, %v619
    %v686 = vadd.f32 %v654, %v621
    %v687 = vpack.c.bf16 %v655, %v655
    %v688 = vpack.c.bf16 %v656, %v656
    %v689 = vpack.c.bf16 %v657, %v657
    %v690 = vpack.c.bf16 %v658, %v658
    %v691 = vpack.c.bf16 %v659, %v659
    %v692 = vpack.c.bf16 %v660, %v660
    %v693 = vpack.c.bf16 %v661, %v661
    %v694 = vpack.c.bf16 %v662, %v662
    %v695 = vpack.c.bf16 %v663, %v663
    %v696 = vpack.c.bf16 %v664, %v664
    %v697 = vpack.c.bf16 %v665, %v665
    %v698 = vpack.c.bf16 %v666, %v666
    %v699 = vpack.c.bf16 %v667, %v667
    %v700 = vpack.c.bf16 %v668, %v668
    %v701 = vpack.c.bf16 %v669, %v669
    %v702 = vpack.c.bf16 %v670, %v670
    %v703 = vpack.c.bf16 %v671, %v671
    %v704 = vpack.c.bf16 %v672, %v672
    %v705 = vpack.c.bf16 %v673, %v673
    %v706 = vpack.c.bf16 %v674, %v674
    %v707 = vpack.c.bf16 %v675, %v675
    %v708 = vpack.c.bf16 %v676, %v676
    %v709 = vpack.c.bf16 %v677, %v677
    %v710 = vpack.c.bf16 %v678, %v678
    %v711 = vpack.c.bf16 %v679, %v679
    %v712 = vpack.c.bf16 %v680, %v680
    %v713 = vpack.c.bf16 %v681, %v681
    %v714 = vpack.c.bf16 %v682, %v682
    %v715 = vpack.c.bf16 %v683, %v683
    %v716 = vpack.c.bf16 %v684, %v684
    %v717 = vpack.c.bf16 %v685, %v685
    %v718 = vpack.c.bf16 %v686, %v686
    %719 = vst [vmem:[#allocation8] sm:$0xf] %v687
    %720 = vst [vmem:[#allocation8 + $0x4] sm:$0xf] %v688
    %721 = vst [vmem:[#allocation8 + $0x8] sm:$0xf] %v689
    %722 = vst [vmem:[#allocation8 + $0xc] sm:$0xf] %v690
    %723 = vst [vmem:[#allocation8 + $0x10] sm:$0xf] %v691
    %724 = vst [vmem:[#allocation8 + $0x14] sm:$0xf] %v692
    %725 = vst [vmem:[#allocation8 + $0x18] sm:$0xf] %v693
    %726 = vst [vmem:[#allocation8 + $0x1c] sm:$0xf] %v694
    %727 = vst [vmem:[#allocation8 + $0x20] sm:$0xf] %v695
    %728 = vst [vmem:[#allocation8 + $0x24] sm:$0xf] %v696
    %729 = vst [vmem:[#allocation8 + $0x28] sm:$0xf] %v697
    %730 = vst [vmem:[#allocation8 + $0x2c] sm:$0xf] %v698
    %731 = vst [vmem:[#allocation8 + $0x30] sm:$0xf] %v699
    %732 = vst [vmem:[#allocation8 + $0x34] sm:$0xf] %v700
    %733 = vst [vmem:[#allocation8 + $0x38] sm:$0xf] %v701
    %734 = vst [vmem:[#allocation8 + $0x3c] sm:$0xf] %v702
    %735 = vst [vmem:[#allocation8 + $0x40] sm:$0xf] %v703
    %736 = vst [vmem:[#allocation8 + $0x44] sm:$0xf] %v704
    %737 = vst [vmem:[#allocation8 + $0x48] sm:$0xf] %v705
    %738 = vst [vmem:[#allocation8 + $0x4c] sm:$0xf] %v706
    %739 = vst [vmem:[#allocation8 + $0x50] sm:$0xf] %v707
    %740 = vst [vmem:[#allocation8 + $0x54] sm:$0xf] %v708
    %741 = vst [vmem:[#allocation8 + $0x58] sm:$0xf] %v709
    %742 = vst [vmem:[#allocation8 + $0x5c] sm:$0xf] %v710
    %743 = vst [vmem:[#allocation8 + $0x60] sm:$0xf] %v711
    %744 = vst [vmem:[#allocation8 + $0x64] sm:$0xf] %v712
    %745 = vst [vmem:[#allocation8 + $0x68] sm:$0xf] %v713
    %746 = vst [vmem:[#allocation8 + $0x6c] sm:$0xf] %v714
    %747 = vst [vmem:[#allocation8 + $0x70] sm:$0xf] %v715
    %748 = vst [vmem:[#allocation8 + $0x74] sm:$0xf] %v716
    %749 = vst [vmem:[#allocation8 + $0x78] sm:$0xf] %v717
    %750 = vst [vmem:[#allocation8 + $0x7c] sm:$0xf] %v718
    // Predicated region
    $region26: #{tpu_custom_call.1} parent=1 // pred_check
      _
    $region27: #{tpu_custom_call.1} parent=1 // pred_check_branch
      %752 = sbr.rel (0) target = $region29
    $region28: #{tpu_custom_call.1} parent=1 // pred_region
      %754 = vsyncadd [#allocation4], 0
      %s755 = sshll.u32 [#allocation8], 4
      %s756 = int_to_ptr.vmem [resolvable:$true] %s755
      %s757 = sshll.u32 %s3, 4
      %s758 = int_to_ptr.hbm [resolvable:$true] %s757
      %763 = dma.vmem_to_hbm [thread:$0]  %s756, 2048, %s758, [#allocation4], 64, 64, 4
    $region29: #{tpu_custom_call.1} parent=1 // pred_fallthru
      _
    // Predicated region
    $region30: #{tpu_custom_call.1} parent=1 // pred_check
      _
    $region31: #{tpu_custom_call.1} parent=1 // pred_check_branch
      %765 = sbr.rel (0) target = $region33
    $region32: #{tpu_custom_call.1} parent=1 // pred_region
      %767 = dma.done [#allocation4], 2048
    $region33: #{tpu_custom_call.1} parent=1 // pred_fallthru
      _
    %768 = vsyncpa [#allocation3], 1
    %769 = vsyncpa [#allocation6], 1
    %770 = vsyncpa [#allocation4], 1

</llo_original>
